<compile_context>
chip_gen: v7x
topology: tpu7x:2x2x1
jax: 0.10.0
libtpu: 0.0.40
codegen_flags: <defaults>
</compile_context>

<pallas_src>
import jax
import jax.numpy as jnp
from jax import lax
from jax.experimental import pallas as pl
from jax.experimental.pallas import tpu as pltpu


def yolo_head_kernel(x_ref, w_ref, b_ref, o_ref):
    # x_ref: (C_in, t_hw)  -- NCHW block (channels major, pixels minor)
    # w_ref: (C_in, C_out)
    # b_ref: (1, C_out)
    # o_ref: (t_hw, C_out) -- NHWC-ordered output tile
    acc = lax.dot_general(
        x_ref[...], w_ref[...],
        dimension_numbers=(((0,), (0,)), ((), ())),   # contract C_in of both
        preferred_element_type=jnp.float32,
    )                                                  # (t_hw, C_out)
    o_ref[...] = (acc + b_ref[...]).astype(o_ref.dtype)


def yolo_head_forward(x_nchw, weight, bias, *, t_hw=None):
    """x_nchw: (B, 128, H, W); weight: (C_out, 128); bias: (C_out,)
    Returns (B, H, W, C_out) float32, matching
    `detector(x).permute(0, 2, 3, 1).contiguous()`."""
    B, C_in, H, W = x_nchw.shape
    C_out = weight.shape[0]
    HW = H * W

    # Tile over the pixel axis. Keep tiles large (mem-bound kernel) but modest
    # enough for v7x's smaller VMEM; t_hw must be a multiple of 128 unless it
    # spans the whole HW axis (TPU lane constraint on the x block's last dim).
    if t_hw is None:
        t_hw = min(HW, 2048)
    if t_hw != HW:
        t_hw = max(128, (t_hw // 128) * 128)
    # v7x has 2 TensorCores: keep >=2 grid steps when possible so the
    # "parallel" axes can be sharded across both cores.
    if B * pl.cdiv(HW, t_hw) < 2 and HW >= 256:
        t_hw = max(128, (((HW + 1) // 2 + 127) // 128) * 128)

    x3 = x_nchw.reshape(B, C_in, HW)            # free reshape; stays NCHW in HBM
    w_mat = weight.T.astype(x_nchw.dtype)       # (C_in, C_out)
    b_mat = bias.reshape(1, C_out).astype(jnp.float32)

    grid = (B, pl.cdiv(HW, t_hw))

    out = pl.pallas_call(
        yolo_head_kernel,
        out_shape=jax.ShapeDtypeStruct((B, HW, C_out), jnp.float32),
        grid=grid,
        in_specs=[
            # x: (B, C_in, HW) -> block (C_in, t_hw); leading batch dim squeezed.
            pl.BlockSpec((None, C_in, t_hw), lambda b, i: (b, 0, i)),
            # weight / bias: grid-invariant, stay resident in VMEM.
            pl.BlockSpec((C_in, C_out), lambda b, i: (0, 0)),
            pl.BlockSpec((1, C_out), lambda b, i: (0, 0)),
        ],
        out_specs=pl.BlockSpec((None, t_hw, C_out), lambda b, i: (b, i, 0)),
        compiler_params=pltpu.CompilerParams(
            dimension_semantics=("parallel", "parallel")),
    )(x3, w_mat, b_mat)

    return out.reshape(B, H, W, C_out)


if __name__ == "__main__":
    # Module config (small, consistent with the torch module):
    grid_size = 16
    num_classes = 3
    num_anchors = 3
    C_in = 128                               # fixed by nn.Conv2d(128, ...)
    C_out = num_anchors * 5 + num_classes    # 18
    B, H, W = 2, grid_size, grid_size

    key = jax.random.PRNGKey(0)
    kx, kw, kb = jax.random.split(key, 3)

    # Deterministic synthetic parameters (shapes match nn.Conv2d(128, C_out, 1)).
    x = jax.random.normal(kx, (B, C_in, H, W), dtype=jnp.float32)
    weight = jax.random.normal(kw, (C_out, C_in), dtype=jnp.float32) * 0.05
    bias = jax.random.normal(kb, (C_out,), dtype=jnp.float32) * 0.1

    out = yolo_head_forward(x, weight, bias)
    out = jax.block_until_ready(out)

    # Reference: 1x1 conv in NCHW, then permute(0, 2, 3, 1).
    ref = jnp.einsum("bchw,oc->bhwo", x, weight) + bias
    assert out.shape == (B, H, W, C_out)
    assert jnp.allclose(out, ref, atol=1e-4, rtol=1e-4)

    print("KERNEL_OK")
</pallas_src>

<mosaic_0001>
module attributes {stable_mosaic.version = 11 : i64} {
  func.func @yolo_head_kernel(%arg0: i32, %arg1: i32, %arg2: memref<1x128x256xf32, #tpu.memory_space<vmem>>, %arg3: memref<128x18xf32, #tpu.memory_space<vmem>>, %arg4: memref<1x18xf32, #tpu.memory_space<vmem>>, %arg5: memref<1x256x18xf32, #tpu.memory_space<vmem>>) attributes {dimension_semantics = [#tpu.dimension_semantics<parallel>, #tpu.dimension_semantics<parallel>], iteration_bounds = array<i64: 2, 1>, scalar_prefetch = 0 : i64, scratch_operands = 0 : i64, tpu.core_type = #tpu.core_type<tc>, window_params = [{transform_indices = @transform_0, window_bounds = array<i64: 1, 128, 256>}, {pipeline_mode = #tpu.pipeline_mode<synchronous>, transform_indices = @transform_1, window_bounds = array<i64: 128, 18>}, {pipeline_mode = #tpu.pipeline_mode<synchronous>, transform_indices = @transform_2, window_bounds = array<i64: 1, 18>}, {transform_indices = @transform_3, window_bounds = array<i64: 1, 256, 18>}]} {
    %c0 = arith.constant 0 : index
    %c0_0 = arith.constant 0 : index
    %c0_1 = arith.constant 0 : index
    %0 = vector.load %arg2[%c0, %c0_0, %c0_1] : memref<1x128x256xf32, #tpu.memory_space<vmem>>, vector<1x128x256xf32>
    %1 = vector.shape_cast %0 : vector<1x128x256xf32> to vector<128x256xf32>
    %c0_2 = arith.constant 0 : index
    %c0_3 = arith.constant 0 : index
    %2 = vector.load %arg3[%c0_2, %c0_3] : memref<128x18xf32, #tpu.memory_space<vmem>>, vector<128x18xf32>
    %cst = arith.constant dense<0.000000e+00> : vector<256x18xf32>
    %3 = tpu.matmul %1, %2, %cst {dimension_numbers = #tpu.dot_dimension_numbers<[0], [0], [1], [1], [0, 1, 1, 1], [], []>} : vector<128x256xf32>, vector<128x18xf32>, vector<256x18xf32> -> vector<256x18xf32>
    %c0_4 = arith.constant 0 : index
    %c0_5 = arith.constant 0 : index
    %4 = vector.load %arg4[%c0_4, %c0_5] : memref<1x18xf32, #tpu.memory_space<vmem>>, vector<1x18xf32>
    %5 = vector.broadcast %4 : vector<1x18xf32> to vector<256x18xf32>
    %6 = arith.addf %3, %5 : vector<256x18xf32>
    %c0_6 = arith.constant 0 : index
    %c0_7 = arith.constant 0 : index
    %c0_8 = arith.constant 0 : index
    %7 = vector.load %arg5[%c0_6, %c0_7, %c0_8] : memref<1x256x18xf32, #tpu.memory_space<vmem>>, vector<1x256x18xf32>
    %8 = vector.shape_cast %7 : vector<1x256x18xf32> to vector<256x18xf32>
    %9 = vector.shape_cast %6 : vector<256x18xf32> to vector<1x256x18xf32>
    tpu.vector_store %arg5[%c0_6, %c0_7, %c0_8], %9 {strides = array<i32>} : memref<1x256x18xf32, #tpu.memory_space<vmem>>, vector<1x256x18xf32>,
    return
  }
  func.func @transform_0(%arg0: i32, %arg1: i32) -> (i32, i32, i32) {
    %c0_i32 = arith.constant 0 : i32
    %c0_i32_0 = arith.constant 0 : i32
    return %arg0, %c0_i32, %arg1 : i32, i32, i32
  }
  func.func @transform_1(%arg0: i32, %arg1: i32) -> (i32, i32) {
    %c0_i32 = arith.constant 0 : i32
    %c0_i32_0 = arith.constant 0 : i32
    %c0_i32_1 = arith.constant 0 : i32
    return %c0_i32, %c0_i32_0 : i32, i32
  }
  func.func @transform_2(%arg0: i32, %arg1: i32) -> (i32, i32) {
    %c0_i32 = arith.constant 0 : i32
    %c0_i32_0 = arith.constant 0 : i32
    %c0_i32_1 = arith.constant 0 : i32
    return %c0_i32, %c0_i32_0 : i32, i32
  }
  func.func @transform_3(%arg0: i32, %arg1: i32) -> (i32, i32, i32) {
    %c0_i32 = arith.constant 0 : i32
    %c0_i32_0 = arith.constant 0 : i32
    return %arg0, %arg1, %c0_i32 : i32, i32, i32
  }
}

</mosaic_0001>

<llo_original>
// kernel: tpu_custom_call.1
$region0: #{tpu_custom_call.1}
  #allocation0 [shape = 'u32[]', space=smem, size = 0x4, offset = 0x4, fixed_abs, tag = 'smem constant byte address 0x4 - core index']
  #allocation1 [shape = 'u32[144,128]{1,0:T(1,128)}', space=vmem, size = 0x12000, scoped, tag = 'internal scratch']
  %s0 = inlined_call_operand.hbm [shape: f32[2,128,256], index: 0, kind: input, shape index: {}]
  %s1 = inlined_call_operand.vmem [shape: f32[128,18], index: 1, kind: input, shape index: {}]
  %s2 = inlined_call_operand.vmem [shape: f32[1,18], index: 2, kind: input, shape index: {}]
  %s3 = inlined_call_operand.vmem [shape: f32[2,256,18], index: 3, kind: output, shape index: {}]
  %s4 = sld [smem:[#allocation0]]
  $region49: #{tpu_custom_call.1} parent=0
    _
  %s6 = ssub.s32 1, %s4
  %s7 = scalar_select 0, %s6, %s4
  $region1: #{tpu_custom_call.1} parent=0
    #allocation2 [shape = 'u8[262144]{0}', space=vmem, size = 0x40000, scoped, tag = 'input window, operand 0']
    #allocation3 [shape = 's32[2]{0}', space=sflag, size = 0x8, scoped, tag = 'scoped memory for tpu_custom_call.1']
    %8 = vsyncpa [#allocation3], 0
    %s9 = scalar_lea.sflag [#allocation3], 1
    %10 = vsyncpa %s9, 0
    loop: start=0, step=1, limit=4
    $region2: #{tpu_custom_call.1} parent=1 // loop_pre_header
      _
    $region3: #{tpu_custom_call.1} parent=1 // loop_header
      %s12 = sphi 0, %s16
      %p13 = scmp.ge.s32.totalorder %s12, 4
      %s19 = sphi 0, %s31
      %s20 = sphi 0, %s27
      %s21 = sphi 0, %s19
      %s22 = sphi 0, %s20
      %s23 = sphi 0, %s21
      %s24 = sphi 0, %s22
      %s36 = sphi 0, %s38
      %s39 = sphi 0, %s36
      %s40 = sphi 0, %s39
      %s56 = sphi 0, %s40
      %s60 = sphi 0, %s60
      %s62 = sphi 0, %s60
      %s63 = sphi 0, %s62
      %s77 = sphi 0, %s63
      %s81 = sphi 0, %s81
      %s83 = sphi 0, %s81
      %s84 = sphi 0, %s83
      %s98 = sphi 0, %s84
      %s106 = sphi 0, %s108
      %s109 = sphi 0, %s106
      %s110 = sphi 0, %s109
      %s126 = sphi 0, %s110
    $region4: #{tpu_custom_call.1} parent=1 // loop_header_branch
      %15 = sbr.rel (%p13) target = $region8
    $region5: #{tpu_custom_call.1} parent=1 // loop_body
      %s17 = ssub.s32 %s12, 1
      %s18 = ssub.s32 %s12, 2
      %s25 = sadd.s32 1, %s20
      %p26 = scmp.ge.s32.totalorder %s25, 1
      %s27 = scalar_select %p26, 0, %s25
      %s28 = sadd.s32 1, %s19
      %s29 = scalar_select %p26, %s28, %s19
      %p30 = scmp.ge.s32.totalorder %s29, 2
      %s31 = scalar_select %p30, 0, %s29
      %s32 = ssub.s32 %s19, %s31
      %s33 = ssub.s32 %s20, %s27
      %s34 = sor.u32 %s32, %s33
      %p35 = scmp.eq.s32.totalorder %s34, 0
      %s37 = sadd.s32 %s36, 1
      %s38 = scalar_select %p35, %s36, %s37
      %p41 = pneg %p35
      %p42 = scmp.eq.s32.totalorder %s12, 1
      %p43 = por %p41, %p42
      %p44 = scmp.ne.s32.totalorder %s36, %s39
      %p45 = scmp.eq.s32.totalorder %s12, 0
      %p46 = por %p44, %p45
      %p47 = scmp.ne.s32.totalorder %s36, %s39
      %p48 = scmp.eq.s32.totalorder %s17, 1
      %p49 = por %p47, %p48
      %p50 = scmp.ne.s32.totalorder %s39, %s40
      %p51 = scmp.eq.s32.totalorder %s17, 0
      %p52 = por %p50, %p51
      %p53 = scmp.ne.s32.totalorder %s39, %s40
      %p54 = scmp.eq.s32.totalorder %s18, 1
      %p55 = por %p53, %p54
      %p57 = scmp.ne.s32.totalorder %s40, %s56
      %p58 = scmp.eq.s32.totalorder %s18, 0
      %p59 = por %p57, %p58
      %s61 = sadd.s32 %s60, 1
      %p64 = scmp.eq.s32.totalorder %s12, 1
      %p65 = scmp.ne.s32.totalorder %s60, %s62
      %p66 = scmp.eq.s32.totalorder %s12, 0
      %p67 = por %p65, %p66
      %p68 = scmp.ne.s32.totalorder %s60, %s62
      %p69 = scmp.eq.s32.totalorder %s17, 1
      %p70 = por %p68, %p69
      %p71 = scmp.ne.s32.totalorder %s62, %s63
      %p72 = scmp.eq.s32.totalorder %s17, 0
      %p73 = por %p71, %p72
      %p74 = scmp.ne.s32.totalorder %s62, %s63
      %p75 = scmp.eq.s32.totalorder %s18, 1
      %p76 = por %p74, %p75
      %p78 = scmp.ne.s32.totalorder %s63, %s77
      %p79 = scmp.eq.s32.totalorder %s18, 0
      %p80 = por %p78, %p79
      %s82 = sadd.s32 %s81, 1
      %p85 = scmp.eq.s32.totalorder %s12, 1
      %p86 = scmp.ne.s32.totalorder %s81, %s83
      %p87 = scmp.eq.s32.totalorder %s12, 0
      %p88 = por %p86, %p87
      %p89 = scmp.ne.s32.totalorder %s81, %s83
      %p90 = scmp.eq.s32.totalorder %s17, 1
      %p91 = por %p89, %p90
      %p92 = scmp.ne.s32.totalorder %s83, %s84
      %p93 = scmp.eq.s32.totalorder %s17, 0
      %p94 = por %p92, %p93
      %p95 = scmp.ne.s32.totalorder %s83, %s84
      %p96 = scmp.eq.s32.totalorder %s18, 1
      %p97 = por %p95, %p96
      %p99 = scmp.ne.s32.totalorder %s84, %s98
      %p100 = scmp.eq.s32.totalorder %s18, 0
      %p101 = por %p99, %p100
      %s102 = ssub.s32 %s19, %s31
      %s103 = ssub.s32 %s20, %s27
      %s104 = sor.u32 %s102, %s103
      %p105 = scmp.eq.s32.totalorder %s104, 0
      %s107 = sadd.s32 %s106, 1
      %s108 = scalar_select %p105, %s106, %s107
      %p111 = pneg %p105
      %p112 = scmp.eq.s32.totalorder %s12, 1
      %p113 = por %p111, %p112
      %p114 = scmp.ne.s32.totalorder %s106, %s109
      %p115 = scmp.eq.s32.totalorder %s12, 0
      %p116 = por %p114, %p115
      %p117 = scmp.ne.s32.totalorder %s106, %s109
      %p118 = scmp.eq.s32.totalorder %s17, 1
      %p119 = por %p117, %p118
      %p120 = scmp.ne.s32.totalorder %s109, %s110
      %p121 = scmp.eq.s32.totalorder %s17, 0
      %p122 = por %p120, %p121
      %p123 = scmp.ne.s32.totalorder %s109, %s110
      %p124 = scmp.eq.s32.totalorder %s18, 1
      %p125 = por %p123, %p124
      %p127 = scmp.ne.s32.totalorder %s110, %s126
      %p128 = scmp.eq.s32.totalorder %s18, 0
      %p129 = por %p127, %p128
      %p130 = scmp.le.s32.totalorder 1, %s12
      %p131 = scmp.lt.s32.totalorder %s12, 3
      %p132 = pnand %p130, %p131
      %p133 = pneg %p132
      // Predicated region
      $region9: #{tpu_custom_call.1} parent=5 // pred_check
        _
      $region10: #{tpu_custom_call.1} parent=5 // pred_check_branch
        %135 = sbr.rel (%p132) target = $region12
      $region11: #{tpu_custom_call.1} parent=5 // pred_region
        %s136 = ssub.s32 %s12, 1
        // Predicated region
        $region13: #{tpu_custom_call.1} parent=11 // pred_check
          %p137 = pneg %p73
        $region14: #{tpu_custom_call.1} parent=11 // pred_check_branch
          %139 = sbr.rel (%p137) target = $region16
        $region15: #{tpu_custom_call.1} parent=11 // pred_region
          _
        $region16: #{tpu_custom_call.1} parent=11 // pred_fallthru
          _
        // Predicated region
        $region17: #{tpu_custom_call.1} parent=11 // pred_check
          %p140 = pneg %p94
        $region18: #{tpu_custom_call.1} parent=11 // pred_check_branch
          %142 = sbr.rel (%p140) target = $region20
        $region19: #{tpu_custom_call.1} parent=11 // pred_region
          _
        $region20: #{tpu_custom_call.1} parent=11 // pred_fallthru
          _
      $region12: #{tpu_custom_call.1} parent=5 // pred_fallthru
        _
      %p143 = scmp.lt.s32.totalorder %s12, 2
      // Predicated region
      $region21: #{tpu_custom_call.1} parent=5 // pred_check
        %p144 = pneg %p143
      $region22: #{tpu_custom_call.1} parent=5 // pred_check_branch
        %146 = sbr.rel (%p144) target = $region24
      $region23: #{tpu_custom_call.1} parent=5 // pred_region
        // Predicated region
        $region25: #{tpu_custom_call.1} parent=23 // pred_check
          %p147 = pneg %p46
        $region26: #{tpu_custom_call.1} parent=23 // pred_check_branch
          %149 = sbr.rel (%p147) target = $region28
        $region27: #{tpu_custom_call.1} parent=23 // pred_region
          %s150 = sand.u32 %s36, 1
          %s151 = scalar_lea.sflag [#allocation3], %s150
          %s152 = sand.u32 %s36, 1
          %s153 = smul.addr %s152, 256
          %s154 = scalar_lea.vmem [#allocation2], %s153
          %s155 = smul.u32 2, %s20
          %s157 = ssub.s32 4096, 4096
          %158 = vsyncadd %s151, %s157
          %s159 = smul.addr %s19, 32
          %s160 = sadd.s32 %s155, %s159
          %s161 = smul.addr %s160, 128
          %s162 = scalar_lea.hbm %s0, %s161
          %s163 = sshll.u32 %s154, 4
          %s164 = int_to_ptr.vmem [resolvable:$true] %s163
          %169 = dma.hbm_to_vmem [thread:$0]  %s162, 4096, %s164, %s151, 256, 256, 16
        $region28: #{tpu_custom_call.1} parent=23 // pred_fallthru
          _
      $region24: #{tpu_custom_call.1} parent=5 // pred_fallthru
        _
      %p170 = scmp.le.s32.totalorder 1, %s12
      %p171 = scmp.lt.s32.totalorder %s12, 3
      %p172 = pnand %p170, %p171
      %p173 = pneg %p172
      // Predicated region
      $region29: #{tpu_custom_call.1} parent=5 // pred_check
        _
      $region30: #{tpu_custom_call.1} parent=5 // pred_check_branch
        %175 = sbr.rel (%p172) target = $region32
      $region31: #{tpu_custom_call.1} parent=5 // pred_region
        %s176 = ssub.s32 %s12, 1
        %s177 = sand.u32 %s39, 1
        %s178 = scalar_lea.sflag [#allocation3], %s177
        %s179 = sand.u32 %s39, 1
        %s180 = smul.addr %s179, 256
        %s181 = scalar_lea.vmem [#allocation2], %s180
        // Predicated region
        $region33: #{tpu_custom_call.1} parent=31 // pred_check
          %p182 = pneg %p52
        $region34: #{tpu_custom_call.1} parent=31 // pred_check_branch
          %184 = sbr.rel (%p182) target = $region36
        $region35: #{tpu_custom_call.1} parent=31 // pred_region
          %185 = dma.done %s178, 4096
        $region36: #{tpu_custom_call.1} parent=31 // pred_fallthru
          _
        %s186 = sand.u32 %s39, 1
        %s187 = scalar_lea.sflag [#allocation3], %s186
        %s188 = sand.u32 %s39, 1
        %s189 = smul.addr %s188, 256
        %s190 = scalar_lea.vmem [#allocation2], %s189
        %p191 = pneg %p52
        %p192 = pneg %p49
        %p193 = pneg %p73
        %p194 = pneg %p70
        %p195 = pneg %p94
        %p196 = pneg %p91
        %p197 = pneg %p122
        %p198 = pneg %p119
        %s199 = smul.u32 32, %s22
        %p200 = scmp.lt.s32.totalorder %s21, 1
        %s201 = scalar_select %p200, %s21, 1
        %p202 = scmp.lt.s32.totalorder %s199, 31
        %s203 = scalar_select %p202, %s199, 31
        %s204 = smul.addr %s201, 32
        %s205 = sadd.s32 %s203, %s204
        %s206 = smul.addr %s205, 8
        %s207 = scalar_lea.vmem %s3, %s206
        %s208 = smul.u32 2, %s22
        %s209 = smul.u32 32, %s22
        %p210 = scmp.lt.s32.totalorder %s21, 1
        %s211 = scalar_select %p210, %s21, 1
        %p212 = scmp.lt.s32.totalorder %s209, 31
        %s213 = scalar_select %p212, %s209, 31
        %s214 = smul.addr %s211, 32
        %s215 = sadd.s32 %s213, %s214
        %s216 = smul.addr %s215, 8
        %s217 = scalar_lea.vmem %s3, %s216
        %s218 = smul.u32 32, %s22
        %v219 = vld [vmem:[%s181] sm:$0xff]
        %v220 = vld [vmem:[%s181 + $0x8] sm:$0xff]
        %v221 = vld [vmem:[%s181 + $0x10] sm:$0xff]
        %v222 = vld [vmem:[%s181 + $0x18] sm:$0xff]
        %v223 = vld [vmem:[%s181 + $0x20] sm:$0xff]
        %v224 = vld [vmem:[%s181 + $0x28] sm:$0xff]
        %v225 = vld [vmem:[%s181 + $0x30] sm:$0xff]
        %v226 = vld [vmem:[%s181 + $0x38] sm:$0xff]
        %v227 = vld [vmem:[%s181 + $0x40] sm:$0xff]
        %v228 = vld [vmem:[%s181 + $0x48] sm:$0xff]
        %v229 = vld [vmem:[%s181 + $0x50] sm:$0xff]
        %v230 = vld [vmem:[%s181 + $0x58] sm:$0xff]
        %v231 = vld [vmem:[%s181 + $0x60] sm:$0xff]
        %v232 = vld [vmem:[%s181 + $0x68] sm:$0xff]
        %v233 = vld [vmem:[%s181 + $0x70] sm:$0xff]
        %v234 = vld [vmem:[%s181 + $0x78] sm:$0xff]
        %v235 = vld [vmem:[%s181 + $0x80] sm:$0xff]
        %v236 = vld [vmem:[%s181 + $0x88] sm:$0xff]
        %v237 = vld [vmem:[%s181 + $0x90] sm:$0xff]
        %v238 = vld [vmem:[%s181 + $0x98] sm:$0xff]
        %v239 = vld [vmem:[%s181 + $0xa0] sm:$0xff]
        %v240 = vld [vmem:[%s181 + $0xa8] sm:$0xff]
        %v241 = vld [vmem:[%s181 + $0xb0] sm:$0xff]
        %v242 = vld [vmem:[%s181 + $0xb8] sm:$0xff]
        %v243 = vld [vmem:[%s181 + $0xc0] sm:$0xff]
        %v244 = vld [vmem:[%s181 + $0xc8] sm:$0xff]
        %v245 = vld [vmem:[%s181 + $0xd0] sm:$0xff]
        %v246 = vld [vmem:[%s181 + $0xd8] sm:$0xff]
        %v247 = vld [vmem:[%s181 + $0xe0] sm:$0xff]
        %v248 = vld [vmem:[%s181 + $0xe8] sm:$0xff]
        %v249 = vld [vmem:[%s181 + $0xf0] sm:$0xff]
        %v250 = vld [vmem:[%s181 + $0xf8] sm:$0xff]
        %v251 = vld [vmem:[%s1] sm:$0xff]
        %v252 = vld [vmem:[%s1 + $0x8] sm:$0xff]
        %v253 = vld [vmem:[%s1 + $0x10] sm:$0xff]
        %v254 = vld [vmem:[%s1 + $0x18] sm:$0xff]
        %v255 = vld [vmem:[%s1 + $0x20] sm:$0xff]
        %v256 = vld [vmem:[%s1 + $0x28] sm:$0xff]
        %v257 = vld [vmem:[%s1 + $0x30] sm:$0xff]
        %v258 = vld [vmem:[%s1 + $0x38] sm:$0xff]
        %v259 = vld [vmem:[%s1 + $0x40] sm:$0xff]
        %v260 = vld [vmem:[%s1 + $0x48] sm:$0xff]
        %v261 = vld [vmem:[%s1 + $0x50] sm:$0xff]
        %v262 = vld [vmem:[%s1 + $0x58] sm:$0xff]
        %v263 = vld [vmem:[%s1 + $0x60] sm:$0xff]
        %v264 = vld [vmem:[%s1 + $0x68] sm:$0xff]
        %v265 = vld [vmem:[%s1 + $0x70] sm:$0xff]
        %v266 = vld [vmem:[%s1 + $0x78] sm:$0xff]
        %v267 = vld [vmem:[%s2] sm:$0x1]
        %v269 = vlaneseq
        %v270 = vshrl.u32 %v269, 7
        %v271 = vsub.s32 0, %v270
        %v272 = vrot.slane %v267, %v271
        %274 = vxpose.xlu0.b32.start [1/16] %v219, 128
        %275 = vxpose.xlu0.b32.cont [2/16] %v221, 128
        %276 = vxpose.xlu0.b32.cont [3/16] %v223, 128
        %277 = vxpose.xlu0.b32.cont [4/16] %v225, 128
        %278 = vxpose.xlu0.b32.cont [5/16] %v227, 128
        %279 = vxpose.xlu0.b32.cont [6/16] %v229, 128
        %280 = vxpose.xlu0.b32.cont [7/16] %v231, 128
        %281 = vxpose.xlu0.b32.cont [8/16] %v233, 128
        %282 = vxpose.xlu0.b32.cont [9/16] %v235, 128
        %283 = vxpose.xlu0.b32.cont [10/16] %v237, 128
        %284 = vxpose.xlu0.b32.cont [11/16] %v239, 128
        %285 = vxpose.xlu0.b32.cont [12/16] %v241, 128
        %286 = vxpose.xlu0.b32.cont [13/16] %v243, 128
        %287 = vxpose.xlu0.b32.cont [14/16] %v245, 128
        %288 = vxpose.xlu0.b32.cont [15/16] %v247, 128
        %289 = vxpose.xlu0.b32.end [16/16] %v249, 128
        %v290 = vpop.trf.xlu0
        %v291 = vpop.trf.xlu0
        %v292 = vpop.trf.xlu0
        %v293 = vpop.trf.xlu0
        %v294 = vpop.trf.xlu0
        %v295 = vpop.trf.xlu0
        %v296 = vpop.trf.xlu0
        %v297 = vpop.trf.xlu0
        %v298 = vpop.trf.xlu0
        %v299 = vpop.trf.xlu0
        %v300 = vpop.trf.xlu0
        %v301 = vpop.trf.xlu0
        %v302 = vpop.trf.xlu0
        %v303 = vpop.trf.xlu0
        %v304 = vpop.trf.xlu0
        %v305 = vpop.trf.xlu0
        %306 = vxpose.xlu0.b32.start [1/16] %v220, 128
        %307 = vxpose.xlu0.b32.cont [2/16] %v222, 128
        %308 = vxpose.xlu0.b32.cont [3/16] %v224, 128
        %309 = vxpose.xlu0.b32.cont [4/16] %v226, 128
        %310 = vxpose.xlu0.b32.cont [5/16] %v228, 128
        %311 = vxpose.xlu0.b32.cont [6/16] %v230, 128
        %312 = vxpose.xlu0.b32.cont [7/16] %v232, 128
        %313 = vxpose.xlu0.b32.cont [8/16] %v234, 128
        %314 = vxpose.xlu0.b32.cont [9/16] %v236, 128
        %315 = vxpose.xlu0.b32.cont [10/16] %v238, 128
        %316 = vxpose.xlu0.b32.cont [11/16] %v240, 128
        %317 = vxpose.xlu0.b32.cont [12/16] %v242, 128
        %318 = vxpose.xlu0.b32.cont [13/16] %v244, 128
        %319 = vxpose.xlu0.b32.cont [14/16] %v246, 128
        %320 = vxpose.xlu0.b32.cont [15/16] %v248, 128
        %321 = vxpose.xlu0.b32.end [16/16] %v250, 128
        %v322 = vpop.trf.xlu0
        %v323 = vpop.trf.xlu0
        %v324 = vpop.trf.xlu0
        %v325 = vpop.trf.xlu0
        %v326 = vpop.trf.xlu0
        %v327 = vpop.trf.xlu0
        %v328 = vpop.trf.xlu0
        %v329 = vpop.trf.xlu0
        %v330 = vpop.trf.xlu0
        %v331 = vpop.trf.xlu0
        %v332 = vpop.trf.xlu0
        %v333 = vpop.trf.xlu0
        %v334 = vpop.trf.xlu0
        %v335 = vpop.trf.xlu0
        %v336 = vpop.trf.xlu0
        %v337 = vpop.trf.xlu0
        %338 = vmatprep.subr.mxu0 0.0
        %339 = vmatpush1.msra.mxu0 %v251
        %340 = vmatprep.subr.mxu0 0.0
        %341 = vmatpush1.msra.mxu0 %v252
        %342 = vmatprep.subr.mxu0 0.0
        %343 = vmatpush1.msra.mxu0 %v253
        %344 = vmatprep.subr.mxu0 0.0
        %345 = vmatpush1.msra.mxu0 %v254
        %346 = vmatprep.subr.mxu0 0.0
        %347 = vmatpush1.msra.mxu0 %v255
        %348 = vmatprep.subr.mxu0 0.0
        %349 = vmatpush1.msra.mxu0 %v256
        %350 = vmatprep.subr.mxu0 0.0
        %351 = vmatpush1.msra.mxu0 %v257
        %352 = vmatprep.subr.mxu0 0.0
        %353 = vmatpush1.msra.mxu0 %v258
        %354 = vmatprep.subr.mxu0 0.0
        %355 = vmatpush1.msra.mxu0 %v259
        %356 = vmatprep.subr.mxu0 0.0
        %357 = vmatpush1.msra.mxu0 %v260
        %358 = vmatprep.subr.mxu0 0.0
        %359 = vmatpush1.msra.mxu0 %v261
        %360 = vmatprep.subr.mxu0 0.0
        %361 = vmatpush1.msra.mxu0 %v262
        %362 = vmatprep.subr.mxu0 0.0
        %363 = vmatpush1.msra.mxu0 %v263
        %364 = vmatprep.subr.mxu0 0.0
        %365 = vmatpush1.msra.mxu0 %v264
        %366 = vmatprep.subr.mxu0 0.0
        %367 = vmatpush1.msra.mxu0 %v265
        %368 = vmatprep.subr.mxu0 0.0
        %369 = vmatpush1.msra.mxu0 %v266
        %370 = vmatprep.subr.mxu0 0.0
        %371 = vmatpush1.msra.mxu0 0.0
        %372 = vmatprep.subr.mxu0 0.0
        %373 = vmatpush1.msra.mxu0 0.0
        %374 = vmatprep.subr.mxu0 0.0
        %375 = vmatpush1.msra.mxu0 0.0
        %376 = vmatprep.subr.mxu0 0.0
        %377 = vmatpush1.msra.mxu0 0.0
        %378 = vmatprep.subr.mxu0 0.0
        %379 = vmatpush1.msra.mxu0 0.0
        %380 = vmatprep.subr.mxu0 0.0
        %381 = vmatpush1.msra.mxu0 0.0
        %382 = vmatprep.subr.mxu0 0.0
        %383 = vmatpush1.msra.mxu0 0.0
        %384 = vmatprep.subr.mxu0 0.0
        %385 = vmatpush1.msra.mxu0 0.0
        %386 = vmatprep.subr.mxu0 0.0
        %387 = vmatpush1.msra.mxu0 0.0
        %388 = vmatprep.subr.mxu0 0.0
        %389 = vmatpush1.msra.mxu0 0.0
        %390 = vmatprep.subr.mxu0 0.0
        %391 = vmatpush1.msra.mxu0 0.0
        %392 = vmatprep.subr.mxu0 0.0
        %393 = vmatpush1.msra.mxu0 0.0
        %394 = vmatprep.subr.mxu0 0.0
        %395 = vmatpush1.msra.mxu0 0.0
        %396 = vmatprep.subr.mxu0 0.0
        %397 = vmatpush1.msra.mxu0 0.0
        %398 = vmatprep.subr.mxu0 0.0
        %399 = vmatpush1.msra.mxu0 0.0
        %400 = vmatprep.subr.mxu0 0.0
        %401 = vmatpush1.msra.mxu0 0.0
        %402 = vmatprep.mubr.f32.mxu0 0.0
        %403 = vmatmul.mubr.f32.gmra.mrb[0].mxu0 %v290
        %v404 = vpop.f32.mrb[0].mxu0
        %v405 = vadd.f32 %v272, %v404
        %v406 = vpop.f32.mrb[0].mxu0
        %407 = vmatprep.mubr.f32.mxu0 0.0
        %408 = vmatmul.mubr.f32.gmra.mrb[0].mxu0 %v291
        %v409 = vpop.f32.mrb[0].mxu0
        %v410 = vadd.f32 %v272, %v409
        %v411 = vpop.f32.mrb[0].mxu0
        %412 = vmatprep.mubr.f32.mxu0 0.0
        %413 = vmatmul.mubr.f32.gmra.mrb[0].mxu0 %v292
        %v414 = vpop.f32.mrb[0].mxu0
        %v415 = vadd.f32 %v272, %v414
        %v416 = vpop.f32.mrb[0].mxu0
        %417 = vmatprep.mubr.f32.mxu0 0.0
        %418 = vmatmul.mubr.f32.gmra.mrb[0].mxu0 %v293
        %v419 = vpop.f32.mrb[0].mxu0
        %v420 = vadd.f32 %v272, %v419
        %v421 = vpop.f32.mrb[0].mxu0
        %422 = vmatprep.mubr.f32.mxu0 0.0
        %423 = vmatmul.mubr.f32.gmra.mrb[0].mxu0 %v294
        %v424 = vpop.f32.mrb[0].mxu0
        %v425 = vadd.f32 %v272, %v424
        %v426 = vpop.f32.mrb[0].mxu0
        %427 = vmatprep.mubr.f32.mxu0 0.0
        %428 = vmatmul.mubr.f32.gmra.mrb[0].mxu0 %v295
        %v429 = vpop.f32.mrb[0].mxu0
        %v430 = vadd.f32 %v272, %v429
        %v431 = vpop.f32.mrb[0].mxu0
        %432 = vmatprep.mubr.f32.mxu0 0.0
        %433 = vmatmul.mubr.f32.gmra.mrb[0].mxu0 %v296
        %v434 = vpop.f32.mrb[0].mxu0
        %v435 = vadd.f32 %v272, %v434
        %v436 = vpop.f32.mrb[0].mxu0
        %437 = vmatprep.mubr.f32.mxu0 0.0
        %438 = vmatmul.mubr.f32.gmra.mrb[0].mxu0 %v297
        %v439 = vpop.f32.mrb[0].mxu0
        %v440 = vadd.f32 %v272, %v439
        %v441 = vpop.f32.mrb[0].mxu0
        %442 = vmatprep.mubr.f32.mxu0 0.0
        %443 = vmatmul.mubr.f32.gmra.mrb[0].mxu0 %v298
        %v444 = vpop.f32.mrb[0].mxu0
        %v445 = vadd.f32 %v272, %v444
        %v446 = vpop.f32.mrb[0].mxu0
        %447 = vmatprep.mubr.f32.mxu0 0.0
        %448 = vmatmul.mubr.f32.gmra.mrb[0].mxu0 %v299
        %v449 = vpop.f32.mrb[0].mxu0
        %v450 = vadd.f32 %v272, %v449
        %v451 = vpop.f32.mrb[0].mxu0
        %452 = vmatprep.mubr.f32.mxu0 0.0
        %453 = vmatmul.mubr.f32.gmra.mrb[0].mxu0 %v300
        %v454 = vpop.f32.mrb[0].mxu0
        %v455 = vadd.f32 %v272, %v454
        %v456 = vpop.f32.mrb[0].mxu0
        %457 = vmatprep.mubr.f32.mxu0 0.0
        %458 = vmatmul.mubr.f32.gmra.mrb[0].mxu0 %v301
        %v459 = vpop.f32.mrb[0].mxu0
        %v460 = vadd.f32 %v272, %v459
        %v461 = vpop.f32.mrb[0].mxu0
        %462 = vmatprep.mubr.f32.mxu0 0.0
        %463 = vmatmul.mubr.f32.gmra.mrb[0].mxu0 %v302
        %v464 = vpop.f32.mrb[0].mxu0
        %v465 = vadd.f32 %v272, %v464
        %v466 = vpop.f32.mrb[0].mxu0
        %467 = vmatprep.mubr.f32.mxu0 0.0
        %468 = vmatmul.mubr.f32.gmra.mrb[0].mxu0 %v303
        %v469 = vpop.f32.mrb[0].mxu0
        %v470 = vadd.f32 %v272, %v469
        %v471 = vpop.f32.mrb[0].mxu0
        %472 = vmatprep.mubr.f32.mxu0 0.0
        %473 = vmatmul.mubr.f32.gmra.mrb[0].mxu0 %v304
        %v474 = vpop.f32.mrb[0].mxu0
        %v475 = vadd.f32 %v272, %v474
        %v476 = vpop.f32.mrb[0].mxu0
        %477 = vmatprep.mubr.f32.mxu0 0.0
        %478 = vmatmul.mubr.f32.gmra.mrb[0].mxu0 %v305
        %v479 = vpop.f32.mrb[0].mxu0
        %v480 = vadd.f32 %v272, %v479
        %v481 = vpop.f32.mrb[0].mxu0
        %482 = vmatprep.mubr.f32.mxu0 0.0
        %483 = vmatmul.mubr.f32.gmra.mrb[0].mxu0 %v322
        %v484 = vpop.f32.mrb[0].mxu0
        %v485 = vadd.f32 %v272, %v484
        %v486 = vpop.f32.mrb[0].mxu0
        %487 = vmatprep.mubr.f32.mxu0 0.0
        %488 = vmatmul.mubr.f32.gmra.mrb[0].mxu0 %v323
        %v489 = vpop.f32.mrb[0].mxu0
        %v490 = vadd.f32 %v272, %v489
        %v491 = vpop.f32.mrb[0].mxu0
        %492 = vmatprep.mubr.f32.mxu0 0.0
        %493 = vmatmul.mubr.f32.gmra.mrb[0].mxu0 %v324
        %v494 = vpop.f32.mrb[0].mxu0
        %v495 = vadd.f32 %v272, %v494
        %v496 = vpop.f32.mrb[0].mxu0
        %497 = vmatprep.mubr.f32.mxu0 0.0
        %498 = vmatmul.mubr.f32.gmra.mrb[0].mxu0 %v325
        %v499 = vpop.f32.mrb[0].mxu0
        %v500 = vadd.f32 %v272, %v499
        %v501 = vpop.f32.mrb[0].mxu0
        %502 = vmatprep.mubr.f32.mxu0 0.0
        %503 = vmatmul.mubr.f32.gmra.mrb[0].mxu0 %v326
        %v504 = vpop.f32.mrb[0].mxu0
        %v505 = vadd.f32 %v272, %v504
        %v506 = vpop.f32.mrb[0].mxu0
        %507 = vmatprep.mubr.f32.mxu0 0.0
        %508 = vmatmul.mubr.f32.gmra.mrb[0].mxu0 %v327
        %v509 = vpop.f32.mrb[0].mxu0
        %v510 = vadd.f32 %v272, %v509
        %v511 = vpop.f32.mrb[0].mxu0
        %512 = vmatprep.mubr.f32.mxu0 0.0
        %513 = vmatmul.mubr.f32.gmra.mrb[0].mxu0 %v328
        %v514 = vpop.f32.mrb[0].mxu0
        %v515 = vadd.f32 %v272, %v514
        %v516 = vpop.f32.mrb[0].mxu0
        %517 = vmatprep.mubr.f32.mxu0 0.0
        %518 = vmatmul.mubr.f32.gmra.mrb[0].mxu0 %v329
        %v519 = vpop.f32.mrb[0].mxu0
        %v520 = vadd.f32 %v272, %v519
        %v521 = vpop.f32.mrb[0].mxu0
        %522 = vmatprep.mubr.f32.mxu0 0.0
        %523 = vmatmul.mubr.f32.gmra.mrb[0].mxu0 %v330
        %v524 = vpop.f32.mrb[0].mxu0
        %v525 = vadd.f32 %v272, %v524
        %v526 = vpop.f32.mrb[0].mxu0
        %527 = vmatprep.mubr.f32.mxu0 0.0
        %528 = vmatmul.mubr.f32.gmra.mrb[0].mxu0 %v331
        %v529 = vpop.f32.mrb[0].mxu0
        %v530 = vadd.f32 %v272, %v529
        %v531 = vpop.f32.mrb[0].mxu0
        %532 = vmatprep.mubr.f32.mxu0 0.0
        %533 = vmatmul.mubr.f32.gmra.mrb[0].mxu0 %v332
        %v534 = vpop.f32.mrb[0].mxu0
        %v535 = vadd.f32 %v272, %v534
        %v536 = vpop.f32.mrb[0].mxu0
        %537 = vmatprep.mubr.f32.mxu0 0.0
        %538 = vmatmul.mubr.f32.gmra.mrb[0].mxu0 %v333
        %v539 = vpop.f32.mrb[0].mxu0
        %v540 = vadd.f32 %v272, %v539
        %v541 = vpop.f32.mrb[0].mxu0
        %542 = vmatprep.mubr.f32.mxu0 0.0
        %543 = vmatmul.mubr.f32.gmra.mrb[0].mxu0 %v334
        %v544 = vpop.f32.mrb[0].mxu0
        %v545 = vadd.f32 %v272, %v544
        %v546 = vpop.f32.mrb[0].mxu0
        %547 = vmatprep.mubr.f32.mxu0 0.0
        %548 = vmatmul.mubr.f32.gmra.mrb[0].mxu0 %v335
        %v549 = vpop.f32.mrb[0].mxu0
        %v550 = vadd.f32 %v272, %v549
        %v551 = vpop.f32.mrb[0].mxu0
        %552 = vmatprep.mubr.f32.mxu0 0.0
        %553 = vmatmul.mubr.f32.gmra.mrb[0].mxu0 %v336
        %v554 = vpop.f32.mrb[0].mxu0
        %v555 = vadd.f32 %v272, %v554
        %v556 = vpop.f32.mrb[0].mxu0
        %557 = vmatprep.mubr.f32.mxu0 0.0
        %558 = vmatmul.mubr.f32.gmra.mrb[0].mxu0 %v337
        %v559 = vpop.f32.mrb[0].mxu0
        %v560 = vadd.f32 %v272, %v559
        %v561 = vpop.f32.mrb[0].mxu0
        %562 = vdwg.mxu0
        %vm563 = vcmask 146432
        %564 = vst.msk [vmem:[%s217] sm:$0xff] %vm563, %v405
        %565 = vst.msk [vmem:[%s217 + $0x8] sm:$0xff] %vm563, %v410
        %566 = vst.msk [vmem:[%s217 + $0x10] sm:$0xff] %vm563, %v415
        %567 = vst.msk [vmem:[%s217 + $0x18] sm:$0xff] %vm563, %v420
        %568 = vst.msk [vmem:[%s217 + $0x20] sm:$0xff] %vm563, %v425
        %569 = vst.msk [vmem:[%s217 + $0x28] sm:$0xff] %vm563, %v430
        %570 = vst.msk [vmem:[%s217 + $0x30] sm:$0xff] %vm563, %v435
        %571 = vst.msk [vmem:[%s217 + $0x38] sm:$0xff] %vm563, %v440
        %572 = vst.msk [vmem:[%s217 + $0x40] sm:$0xff] %vm563, %v445
        %573 = vst.msk [vmem:[%s217 + $0x48] sm:$0xff] %vm563, %v450
        %574 = vst.msk [vmem:[%s217 + $0x50] sm:$0xff] %vm563, %v455
        %575 = vst.msk [vmem:[%s217 + $0x58] sm:$0xff] %vm563, %v460
        %576 = vst.msk [vmem:[%s217 + $0x60] sm:$0xff] %vm563, %v465
        %577 = vst.msk [vmem:[%s217 + $0x68] sm:$0xff] %vm563, %v470
        %578 = vst.msk [vmem:[%s217 + $0x70] sm:$0xff] %vm563, %v475
        %579 = vst.msk [vmem:[%s217 + $0x78] sm:$0xff] %vm563, %v480
        %580 = vst.msk [vmem:[%s217 + $0x80] sm:$0xff] %vm563, %v485
        %581 = vst.msk [vmem:[%s217 + $0x88] sm:$0xff] %vm563, %v490
        %582 = vst.msk [vmem:[%s217 + $0x90] sm:$0xff] %vm563, %v495
        %583 = vst.msk [vmem:[%s217 + $0x98] sm:$0xff] %vm563, %v500
        %584 = vst.msk [vmem:[%s217 + $0xa0] sm:$0xff] %vm563, %v505
        %585 = vst.msk [vmem:[%s217 + $0xa8] sm:$0xff] %vm563, %v510
        %586 = vst.msk [vmem:[%s217 + $0xb0] sm:$0xff] %vm563, %v515
        %587 = vst.msk [vmem:[%s217 + $0xb8] sm:$0xff] %vm563, %v520
        %588 = vst.msk [vmem:[%s217 + $0xc0] sm:$0xff] %vm563, %v525
        %589 = vst.msk [vmem:[%s217 + $0xc8] sm:$0xff] %vm563, %v530
        %590 = vst.msk [vmem:[%s217 + $0xd0] sm:$0xff] %vm563, %v535
        %591 = vst.msk [vmem:[%s217 + $0xd8] sm:$0xff] %vm563, %v540
        %592 = vst.msk [vmem:[%s217 + $0xe0] sm:$0xff] %vm563, %v545
        %593 = vst.msk [vmem:[%s217 + $0xe8] sm:$0xff] %vm563, %v550
        %594 = vst.msk [vmem:[%s217 + $0xf0] sm:$0xff] %vm563, %v555
        %595 = vst.msk [vmem:[%s217 + $0xf8] sm:$0xff] %vm563, %v560
        %s596 = smul.u32 32, %s22
        %p597 = scmp.lt.s32.totalorder %s21, 1
        %s598 = scalar_select %p597, %s21, 1
        %p599 = scmp.lt.s32.totalorder %s596, 31
        %s600 = scalar_select %p599, %s596, 31
        %s601 = smul.addr %s598, 32
        %s602 = sadd.s32 %s600, %s601
        %s603 = smul.addr %s602, 8
        %s604 = scalar_lea.vmem %s3, %s603
        // Predicated region
        $region37: #{tpu_custom_call.1} parent=31 // pred_check
          %p605 = pneg %p119
        $region38: #{tpu_custom_call.1} parent=31 // pred_check_branch
          %607 = sbr.rel (%p605) target = $region40
        $region39: #{tpu_custom_call.1} parent=31 // pred_region
          %s608 = smul.u32 32, %s22
        $region40: #{tpu_custom_call.1} parent=31 // pred_fallthru
          _
      $region32: #{tpu_custom_call.1} parent=5 // pred_fallthru
        _
      %p609 = scmp.le.s32.totalorder 2, %s12
      // Predicated region
      $region41: #{tpu_custom_call.1} parent=5 // pred_check
        %p610 = pneg %p609
      $region42: #{tpu_custom_call.1} parent=5 // pred_check_branch
        %612 = sbr.rel (%p610) target = $region44
      $region43: #{tpu_custom_call.1} parent=5 // pred_region
        %s613 = ssub.s32 %s12, 2
        // Predicated region
        $region45: #{tpu_custom_call.1} parent=43 // pred_check
          %p614 = pneg %p125
        $region46: #{tpu_custom_call.1} parent=43 // pred_check_branch
          %616 = sbr.rel (%p614) target = $region48
        $region47: #{tpu_custom_call.1} parent=43 // pred_region
          %s617 = smul.u32 32, %s24
          %p618 = scmp.lt.s32.totalorder %s23, 1
          %s619 = scalar_select %p618, %s23, 1
          %p620 = scmp.lt.s32.totalorder %s617, 31
          %s621 = scalar_select %p620, %s617, 31
          %s622 = smul.addr %s619, 32
          %s623 = sadd.s32 %s621, %s622
          %s624 = smul.addr %s623, 8
          %s625 = scalar_lea.vmem %s3, %s624
        $region48: #{tpu_custom_call.1} parent=43 // pred_fallthru
          _
      $region44: #{tpu_custom_call.1} parent=5 // pred_fallthru
        _
    $region6: #{tpu_custom_call.1} parent=1 // loop_footer
      %s16 = sadd.s32 1, %s12
    $region7: #{tpu_custom_call.1} parent=1 // loop_footer_branch
      %11 = sbr.rel target = $region3
    $region8: #{tpu_custom_call.1} parent=1 // loop_exit
      _
    %626 = vsyncpa [#allocation3], 1
    %s627 = scalar_lea.sflag [#allocation3], 1
    %628 = vsyncpa %s627, 1

</llo_original>
